<compile_context>
chip_gen: v7x
topology: tpu7x:2x2x1
jax: 0.10.0
libtpu: 0.0.40
codegen_flags: <defaults>
</compile_context>

<pallas_src>
import functools

import jax
import jax.numpy as jnp
from jax.experimental import pallas as pl
from jax.experimental.pallas import tpu as pltpu

_LANE = 128    # hidden/output feature dims padded to the 128-wide lane axis
_MAX_BM = 512  # max batch rows per grid block (sweet spot per HBM-roofline data)


def _round_up(n, m):
    return ((n + m - 1) // m) * m


def _choose_bm(b_padded, max_bm=_MAX_BM):
    """Largest 128-multiple block <= max_bm that divides b_padded, preferring a
    grid of >= 2 blocks so both v7x TensorCores stay busy."""
    best = 128
    for cand in range(128, min(max_bm, b_padded) + 1, 128):
        if b_padded % cand != 0:
            continue
        if b_padded // cand >= 2 or b_padded == 128:
            best = cand
    return best


def _fused_mlp_kernel(*refs, num_layers):
    """Entire MLP in one kernel body.

    refs = (x_ref, w0_ref, b0_ref, ..., w_{L-1}_ref, b_{L-1}_ref, out_ref)
      x_ref:   (BM, Din)            VMEM, f32 (raw, un-padded feature dim)
      w_i_ref: (Din_i, Dout_i_pad)  VMEM, bf16 (resident across grid steps)
      b_i_ref: (1, Dout_i_pad)      VMEM, f32
      out_ref: (BM, Dout_last_pad)  VMEM, f32 (lane-dense store)
    """
    x_ref = refs[0]
    out_ref = refs[-1]
    param_refs = refs[1:-1]

    h = x_ref[...]  # f32 activations
    for i in range(num_layers):
        w = param_refs[2 * i][...]        # bf16
        b = param_refs[2 * i + 1][...]    # f32
        # bf16 MXU matmul with f32 accumulation; bias add / ReLU stay f32 (VPU).
        h = jnp.dot(h.astype(jnp.bfloat16), w,
                    preferred_element_type=jnp.float32) + b
        if i < num_layers - 1:
            h = jnp.maximum(h, 0.0)       # ReLU on hidden layers only
    out_ref[...] = h.astype(out_ref.dtype)


def init_qnetwork_params(key, state_size, action_size, hidden_layers):
    """Deterministic init mirroring nn.Linear's U(-1/sqrt(fan_in), 1/sqrt(fan_in)).

    Weights are stored as (in_features, out_features) so y = x @ W + b matches
    PyTorch's x @ W_t.T + b.
    """
    sizes = [state_size] + list(hidden_layers) + [action_size]
    params = []
    for i in range(len(sizes) - 1):
        fan_in, fan_out = sizes[i], sizes[i + 1]
        key, kw, kb = jax.random.split(key, 3)
        bound = 1.0 / jnp.sqrt(jnp.float32(fan_in))
        w = jax.random.uniform(kw, (fan_in, fan_out), jnp.float32, -bound, bound)
        b = jax.random.uniform(kb, (fan_out,), jnp.float32, -bound, bound)
        params.append((w, b))
    return params


def pack_params(params):
    """One-time layout prep.

    - Layer 0 keeps its raw in-dim (no 16x-inflated x pad), only rounded up to a
      multiple of 8 for sublane alignment (a no-op for state_size=8).
    - Later layers pad their in-dim to the previous layer's padded out-dim (128x).
    - All out-dims padded to 128 (lane-dense). Padding is zeros -> exact math.
    - Weights stored bf16 (MXU input dtype); biases stay f32.
    """
    packed = []
    prev_out_p = None
    for idx, (w, b) in enumerate(params):
        din, dout = w.shape
        din_p = _round_up(din, 8) if idx == 0 else prev_out_p
        dout_p = _round_up(dout, _LANE)
        w_p = (jnp.zeros((din_p, dout_p), jnp.bfloat16)
               .at[:din, :dout].set(w.astype(jnp.bfloat16)))
        b_p = (jnp.zeros((1, dout_p), jnp.float32)
               .at[0, :dout].set(b.astype(jnp.float32)))
        packed.append((w_p, b_p))
        prev_out_p = dout_p
    return packed


def _forward_impl(state, packed_params, action_size):
    B, Din = state.shape
    num_layers = len(packed_params)
    din_p = packed_params[0][0].shape[0]
    dout_last_p = packed_params[-1][0].shape[1]

    Bp = _round_up(B, 128)
    bm = _choose_bm(Bp)

    if Bp == B and din_p == Din:
        x = state  # aligned fast path: no wrapper-side pad copy / extra HBM pass
    else:
        x = jnp.zeros((Bp, din_p), state.dtype).at[:B, :Din].set(state)

    flat_params = []
    in_specs = [pl.BlockSpec((bm, din_p), lambda i: (i, 0))]
    for w_p, b_p in packed_params:
        flat_params.append(w_p)
        flat_params.append(b_p)
        # Constant index_map -> weights/biases stay VMEM-resident across blocks.
        in_specs.append(pl.BlockSpec(w_p.shape, lambda i: (0, 0)))
        in_specs.append(pl.BlockSpec(b_p.shape, lambda i: (0, 0)))

    kernel = functools.partial(_fused_mlp_kernel, num_layers=num_layers)
    out_padded = pl.pallas_call(
        kernel,
        out_shape=jax.ShapeDtypeStruct((Bp, dout_last_p), jnp.float32),
        grid=(Bp // bm,),
        in_specs=in_specs,
        # Lane-dense (128-wide) output block; narrow action_size slice happens
        # outside the kernel to avoid masked partial stores.
        out_specs=pl.BlockSpec((bm, dout_last_p), lambda i: (i, 0)),
        compiler_params=pltpu.CompilerParams(
            dimension_semantics=("parallel",)),  # batch blocks shard across TCs
    )(x, *flat_params)

    return out_padded[:B, :action_size]


# jit so any padding + pallas_call + final slice compile into one dispatch;
# action_size is static.
qnetwork_forward = jax.jit(_forward_impl, static_argnums=(2,))


if __name__ == "__main__":
    # Small, forward-consistent shapes: state_size=8, hidden_layers=[32, 64],
    # action_size=4, batch=2 (dispatch-bound at this size; structure tuned for
    # the large-batch training path).
    state_size = 8
    action_size = 4
    hidden_layers = [32, 64]
    batch = 2

    key = jax.random.PRNGKey(0)
    key, kx = jax.random.split(key)
    state = jax.random.normal(kx, (batch, state_size), jnp.float32)

    params = init_qnetwork_params(key, state_size, action_size, hidden_layers)
    packed = pack_params(params)  # kernel-ready layout + bf16 cast, done once

    out = qnetwork_forward(state, packed, action_size)
    out = jax.block_until_ready(out)

    # Pure-JAX f32 reference of the same math. The kernel feeds bf16 into the MXU
    # (f32 accumulation), so compare with a loosened tolerance.
    ref = state
    for i, (w, b) in enumerate(params):
        ref = ref @ w + b
        if i < len(params) - 1:
            ref = jnp.maximum(ref, 0.0)
    assert out.shape == (batch, action_size)
    assert jnp.allclose(out, ref, atol=3e-2, rtol=3e-2), (out, ref)

    print("KERNEL_OK")
</pallas_src>

<mosaic_0001>
module attributes {stable_mosaic.version = 11 : i64} {
  func.func @_fused_mlp_kernel(%arg0: i32, %arg1: memref<128x8xf32, #tpu.memory_space<vmem>>, %arg2: memref<8x128xbf16, #tpu.memory_space<vmem>>, %arg3: memref<1x128xf32, #tpu.memory_space<vmem>>, %arg4: memref<128x128xbf16, #tpu.memory_space<vmem>>, %arg5: memref<1x128xf32, #tpu.memory_space<vmem>>, %arg6: memref<128x128xbf16, #tpu.memory_space<vmem>>, %arg7: memref<1x128xf32, #tpu.memory_space<vmem>>, %arg8: memref<128x128xf32, #tpu.memory_space<vmem>>) attributes {dimension_semantics = [#tpu.dimension_semantics<parallel>], iteration_bounds = array<i64: 1>, scalar_prefetch = 0 : i64, scratch_operands = 0 : i64, tpu.core_type = #tpu.core_type<tc>, window_params = [{transform_indices = @transform_0, window_bounds = array<i64: 128, 8>}, {pipeline_mode = #tpu.pipeline_mode<synchronous>, transform_indices = @transform_1, window_bounds = array<i64: 8, 128>}, {pipeline_mode = #tpu.pipeline_mode<synchronous>, transform_indices = @transform_2, window_bounds = array<i64: 1, 128>}, {pipeline_mode = #tpu.pipeline_mode<synchronous>, transform_indices = @transform_3, window_bounds = array<i64: 128, 128>}, {pipeline_mode = #tpu.pipeline_mode<synchronous>, transform_indices = @transform_4, window_bounds = array<i64: 1, 128>}, {pipeline_mode = #tpu.pipeline_mode<synchronous>, transform_indices = @transform_5, window_bounds = array<i64: 128, 128>}, {pipeline_mode = #tpu.pipeline_mode<synchronous>, transform_indices = @transform_6, window_bounds = array<i64: 1, 128>}, {transform_indices = @transform_7, window_bounds = array<i64: 128, 128>}]} {
    %c0 = arith.constant 0 : index
    %c0_0 = arith.constant 0 : index
    %0 = vector.load %arg1[%c0, %c0_0] : memref<128x8xf32, #tpu.memory_space<vmem>>, vector<128x8xf32>
    %c0_1 = arith.constant 0 : index
    %c0_2 = arith.constant 0 : index
    %1 = vector.load %arg2[%c0_1, %c0_2] : memref<8x128xbf16, #tpu.memory_space<vmem>>, vector<8x128xbf16>
    %c0_3 = arith.constant 0 : index
    %c0_4 = arith.constant 0 : index
    %2 = vector.load %arg3[%c0_3, %c0_4] : memref<1x128xf32, #tpu.memory_space<vmem>>, vector<1x128xf32>
    %3 = arith.truncf %0 : vector<128x8xf32> to vector<128x8xbf16>
    %cst = arith.constant dense<0.000000e+00> : vector<128x128xf32>
    %4 = tpu.matmul %3, %1, %cst {dimension_numbers = #tpu.dot_dimension_numbers<[1], [0], [0], [1], [0, 0, 1, 1], [], []>} : vector<128x8xbf16>, vector<8x128xbf16>, vector<128x128xf32> -> vector<128x128xf32>
    %5 = vector.broadcast %2 : vector<1x128xf32> to vector<128x128xf32>
    %6 = arith.addf %4, %5 : vector<128x128xf32>
    %cst_5 = arith.constant 0.000000e+00 : f32
    %7 = vector.broadcast %cst_5 : f32 to vector<128x128xf32>
    %8 = arith.maximumf %6, %7 : vector<128x128xf32>
    %c0_6 = arith.constant 0 : index
    %c0_7 = arith.constant 0 : index
    %9 = vector.load %arg4[%c0_6, %c0_7] : memref<128x128xbf16, #tpu.memory_space<vmem>>, vector<128x128xbf16>
    %c0_8 = arith.constant 0 : index
    %c0_9 = arith.constant 0 : index
    %10 = vector.load %arg5[%c0_8, %c0_9] : memref<1x128xf32, #tpu.memory_space<vmem>>, vector<1x128xf32>
    %11 = arith.truncf %8 : vector<128x128xf32> to vector<128x128xbf16>
    %cst_10 = arith.constant dense<0.000000e+00> : vector<128x128xf32>
    %12 = tpu.matmul %11, %9, %cst_10 {dimension_numbers = #tpu.dot_dimension_numbers<[1], [0], [0], [1], [0, 0, 1, 1], [], []>} : vector<128x128xbf16>, vector<128x128xbf16>, vector<128x128xf32> -> vector<128x128xf32>
    %13 = vector.broadcast %10 : vector<1x128xf32> to vector<128x128xf32>
    %14 = arith.addf %12, %13 : vector<128x128xf32>
    %cst_11 = arith.constant 0.000000e+00 : f32
    %15 = vector.broadcast %cst_11 : f32 to vector<128x128xf32>
    %16 = arith.maximumf %14, %15 : vector<128x128xf32>
    %c0_12 = arith.constant 0 : index
    %c0_13 = arith.constant 0 : index
    %17 = vector.load %arg6[%c0_12, %c0_13] : memref<128x128xbf16, #tpu.memory_space<vmem>>, vector<128x128xbf16>
    %c0_14 = arith.constant 0 : index
    %c0_15 = arith.constant 0 : index
    %18 = vector.load %arg7[%c0_14, %c0_15] : memref<1x128xf32, #tpu.memory_space<vmem>>, vector<1x128xf32>
    %19 = arith.truncf %16 : vector<128x128xf32> to vector<128x128xbf16>
    %cst_16 = arith.constant dense<0.000000e+00> : vector<128x128xf32>
    %20 = tpu.matmul %19, %17, %cst_16 {dimension_numbers = #tpu.dot_dimension_numbers<[1], [0], [0], [1], [0, 0, 1, 1], [], []>} : vector<128x128xbf16>, vector<128x128xbf16>, vector<128x128xf32> -> vector<128x128xf32>
    %21 = vector.broadcast %18 : vector<1x128xf32> to vector<128x128xf32>
    %22 = arith.addf %20, %21 : vector<128x128xf32>
    %c0_17 = arith.constant 0 : index
    %c0_18 = arith.constant 0 : index
    %23 = vector.load %arg8[%c0_17, %c0_18] : memref<128x128xf32, #tpu.memory_space<vmem>>, vector<128x128xf32>
    tpu.vector_store %arg8[%c0_17, %c0_18], %22 {strides = array<i32>} : memref<128x128xf32, #tpu.memory_space<vmem>>, vector<128x128xf32>,
    return
  }
  func.func @transform_0(%arg0: i32) -> (i32, i32) {
    %c0_i32 = arith.constant 0 : i32
    %c0_i32_0 = arith.constant 0 : i32
    return %arg0, %c0_i32 : i32, i32
  }
  func.func @transform_1(%arg0: i32) -> (i32, i32) {
    %c0_i32 = arith.constant 0 : i32
    %c0_i32_0 = arith.constant 0 : i32
    %c0_i32_1 = arith.constant 0 : i32
    return %c0_i32, %c0_i32_0 : i32, i32
  }
  func.func @transform_2(%arg0: i32) -> (i32, i32) {
    %c0_i32 = arith.constant 0 : i32
    %c0_i32_0 = arith.constant 0 : i32
    %c0_i32_1 = arith.constant 0 : i32
    return %c0_i32, %c0_i32_0 : i32, i32
  }
  func.func @transform_3(%arg0: i32) -> (i32, i32) {
    %c0_i32 = arith.constant 0 : i32
    %c0_i32_0 = arith.constant 0 : i32
    %c0_i32_1 = arith.constant 0 : i32
    return %c0_i32, %c0_i32_0 : i32, i32
  }
  func.func @transform_4(%arg0: i32) -> (i32, i32) {
    %c0_i32 = arith.constant 0 : i32
    %c0_i32_0 = arith.constant 0 : i32
    %c0_i32_1 = arith.constant 0 : i32
    return %c0_i32, %c0_i32_0 : i32, i32
  }
  func.func @transform_5(%arg0: i32) -> (i32, i32) {
    %c0_i32 = arith.constant 0 : i32
    %c0_i32_0 = arith.constant 0 : i32
    %c0_i32_1 = arith.constant 0 : i32
    return %c0_i32, %c0_i32_0 : i32, i32
  }
  func.func @transform_6(%arg0: i32) -> (i32, i32) {
    %c0_i32 = arith.constant 0 : i32
    %c0_i32_0 = arith.constant 0 : i32
    %c0_i32_1 = arith.constant 0 : i32
    return %c0_i32, %c0_i32_0 : i32, i32
  }
  func.func @transform_7(%arg0: i32) -> (i32, i32) {
    %c0_i32 = arith.constant 0 : i32
    %c0_i32_0 = arith.constant 0 : i32
    return %arg0, %c0_i32 : i32, i32
  }
}

</mosaic_0001>

<llo_original>
// kernel: _forward_impl.1
$region0: #{_forward_impl.1}
  #allocation0 [shape = 'u32[]', space=smem, size = 0x4, offset = 0x4, fixed_abs, tag = 'smem constant byte address 0x4 - core index']
  #allocation1 [shape = 'u32[144,128]{1,0:T(1,128)}', space=vmem, size = 0x12000, scoped, tag = 'internal scratch']
  %s0 = inlined_call_operand.vmem [shape: f32[128,8], index: 0, kind: input, shape index: {}]
  %s1 = inlined_call_operand.vmem [shape: bf16[8,128], index: 1, kind: input, shape index: {}]
  %s2 = inlined_call_operand.vmem [shape: f32[1,128], index: 2, kind: input, shape index: {}]
  %s3 = inlined_call_operand.vmem [shape: bf16[128,128], index: 3, kind: input, shape index: {}]
  %s4 = inlined_call_operand.vmem [shape: f32[1,128], index: 4, kind: input, shape index: {}]
  %s5 = inlined_call_operand.vmem [shape: bf16[128,128], index: 5, kind: input, shape index: {}]
  %s6 = inlined_call_operand.vmem [shape: f32[1,128], index: 6, kind: input, shape index: {}]
  %s7 = inlined_call_operand.vmem [shape: f32[128,128], index: 7, kind: output, shape index: {}]
  %s8 = sld [smem:[#allocation0]]
  $region38: #{_forward_impl.1} parent=0
    _
  %s10 = ssub.s32 1, %s8
  %s11 = scalar_select 0, %s10, %s8
  // Predicated region
  $region2: #{_forward_impl.1} parent=0 // pred_check
    _
  $region3: #{_forward_impl.1} parent=0 // pred_check_branch
    %13 = sbr.rel (0) target = $region5
  $region4: #{_forward_impl.1} parent=0 // pred_region
    _
  $region5: #{_forward_impl.1} parent=0 // pred_fallthru
    _
  // Predicated region
  $region6: #{_forward_impl.1} parent=0 // pred_check
    _
  $region7: #{_forward_impl.1} parent=0 // pred_check_branch
    %15 = sbr.rel (0) target = $region9
  $region8: #{_forward_impl.1} parent=0 // pred_region
    _
  $region9: #{_forward_impl.1} parent=0 // pred_fallthru
    _
  // Predicated region
  $region10: #{_forward_impl.1} parent=0 // pred_check
    _
  $region11: #{_forward_impl.1} parent=0 // pred_check_branch
    %17 = sbr.rel (0) target = $region13
  $region12: #{_forward_impl.1} parent=0 // pred_region
    _
  $region13: #{_forward_impl.1} parent=0 // pred_fallthru
    _
  // Predicated region
  $region14: #{_forward_impl.1} parent=0 // pred_check
    _
  $region15: #{_forward_impl.1} parent=0 // pred_check_branch
    %19 = sbr.rel (0) target = $region17
  $region16: #{_forward_impl.1} parent=0 // pred_region
    _
  $region17: #{_forward_impl.1} parent=0 // pred_fallthru
    _
  // Predicated region
  $region18: #{_forward_impl.1} parent=0 // pred_check
    _
  $region19: #{_forward_impl.1} parent=0 // pred_check_branch
    %21 = sbr.rel (0) target = $region21
  $region20: #{_forward_impl.1} parent=0 // pred_region
    _
  $region21: #{_forward_impl.1} parent=0 // pred_fallthru
    _
  // Predicated region
  $region22: #{_forward_impl.1} parent=0 // pred_check
    _
  $region23: #{_forward_impl.1} parent=0 // pred_check_branch
    %23 = sbr.rel (0) target = $region25
  $region24: #{_forward_impl.1} parent=0 // pred_region
    _
  $region25: #{_forward_impl.1} parent=0 // pred_fallthru
    _
  // Predicated region
  $region26: #{_forward_impl.1} parent=0 // pred_check
    _
  $region27: #{_forward_impl.1} parent=0 // pred_check_branch
    %25 = sbr.rel (0) target = $region29
  $region28: #{_forward_impl.1} parent=0 // pred_region
    _
  $region29: #{_forward_impl.1} parent=0 // pred_fallthru
    _
  %v27 = vld [vmem:[%s0] sm:$0xff]
  %v28 = vld [vmem:[%s0 + $0x8] sm:$0xff]
  %v29 = vld [vmem:[%s0 + $0x10] sm:$0xff]
  %v30 = vld [vmem:[%s0 + $0x18] sm:$0xff]
  %v31 = vld [vmem:[%s0 + $0x20] sm:$0xff]
  %v32 = vld [vmem:[%s0 + $0x28] sm:$0xff]
  %v33 = vld [vmem:[%s0 + $0x30] sm:$0xff]
  %v34 = vld [vmem:[%s0 + $0x38] sm:$0xff]
  %v35 = vld [vmem:[%s0 + $0x40] sm:$0xff]
  %v36 = vld [vmem:[%s0 + $0x48] sm:$0xff]
  %v37 = vld [vmem:[%s0 + $0x50] sm:$0xff]
  %v38 = vld [vmem:[%s0 + $0x58] sm:$0xff]
  %v39 = vld [vmem:[%s0 + $0x60] sm:$0xff]
  %v40 = vld [vmem:[%s0 + $0x68] sm:$0xff]
  %v41 = vld [vmem:[%s0 + $0x70] sm:$0xff]
  %v42 = vld [vmem:[%s0 + $0x78] sm:$0xff]
  %v43 = vld [vmem:[%s1] sm:$0xf]
  %v44 = vld [vmem:[%s2] sm:$0x1]
  %v45 = vpack.c.bf16 %v28, %v27
  %v46 = vpack.c.bf16 %v30, %v29
  %v47 = vpack.c.bf16 %v32, %v31
  %v48 = vpack.c.bf16 %v34, %v33
  %v49 = vpack.c.bf16 %v36, %v35
  %v50 = vpack.c.bf16 %v38, %v37
  %v51 = vpack.c.bf16 %v40, %v39
  %v52 = vpack.c.bf16 %v42, %v41
  %v54 = vlaneseq
  %v55 = vshrl.u32 %v54, 7
  %v56 = vsub.s32 0, %v55
  %v57 = vrot.slane %v44, %v56
  %vm59 = vcmask 64512
  %v61 = vsel %vm59, %v45, 0
  %v64 = vsel %vm59, %v46, 0
  %v67 = vsel %vm59, %v47, 0
  %v70 = vsel %vm59, %v48, 0
  %v73 = vsel %vm59, %v49, 0
  %v76 = vsel %vm59, %v50, 0
  %v79 = vsel %vm59, %v51, 0
  %v82 = vsel %vm59, %v52, 0
  %vm84 = vcmask 1043456
  %v86 = vsel %vm84, %v43, 0
  %88 = vmatprep.subr.bf16.mxu0 0
  %89 = vmatpush1.bf16.msra.mxu0 %v86
  %90 = vmatprep.subr.bf16.mxu0 0
  %91 = vmatpush1.bf16.msra.mxu0 0
  %92 = vmatprep.subr.bf16.mxu0 0
  %93 = vmatpush1.bf16.msra.mxu0 0
  %94 = vmatprep.subr.bf16.mxu0 0
  %95 = vmatpush1.bf16.msra.mxu0 0
  %96 = vmatprep.subr.bf16.mxu0 0
  %97 = vmatpush1.bf16.msra.mxu0 0
  %98 = vmatprep.subr.bf16.mxu0 0
  %99 = vmatpush1.bf16.msra.mxu0 0
  %100 = vmatprep.subr.bf16.mxu0 0
  %101 = vmatpush1.bf16.msra.mxu0 0
  %102 = vmatprep.subr.bf16.mxu0 0
  %103 = vmatpush1.bf16.msra.mxu0 0
  %104 = vmatprep.subr.bf16.mxu0 0
  %105 = vmatpush1.bf16.msra.mxu0 0
  %106 = vmatprep.subr.bf16.mxu0 0
  %107 = vmatpush1.bf16.msra.mxu0 0
  %108 = vmatprep.subr.bf16.mxu0 0
  %109 = vmatpush1.bf16.msra.mxu0 0
  %110 = vmatprep.subr.bf16.mxu0 0
  %111 = vmatpush1.bf16.msra.mxu0 0
  %112 = vmatprep.subr.bf16.mxu0 0
  %113 = vmatpush1.bf16.msra.mxu0 0
  %114 = vmatprep.subr.bf16.mxu0 0
  %115 = vmatpush1.bf16.msra.mxu0 0
  %116 = vmatprep.subr.bf16.mxu0 0
  %117 = vmatpush1.bf16.msra.mxu0 0
  %118 = vmatprep.subr.bf16.mxu0 0
  %119 = vmatpush1.bf16.msra.mxu0 0
  %120 = vmatprep.mubr.bf16.mxu0 0
  %121 = vmatmul.mubr.bf16.gmra.mrb[0].mxu0 %v61
  %v122 = vpop.f32.mrb[0].mxu0
  %v123 = vadd.f32 %v57, %v122
  %v124 = vpop.f32.mrb[0].mxu0
  %v125 = vpop.f32.mrb[0].mxu0
  %v126 = vadd.f32 %v57, %v125
  %v127 = vpop.f32.mrb[0].mxu0
  %128 = vmatprep.mubr.bf16.mxu0 0
  %129 = vmatmul.mubr.bf16.gmra.mrb[0].mxu0 %v64
  %v130 = vpop.f32.mrb[0].mxu0
  %v131 = vadd.f32 %v57, %v130
  %v132 = vpop.f32.mrb[0].mxu0
  %v133 = vpop.f32.mrb[0].mxu0
  %v134 = vadd.f32 %v57, %v133
  %v135 = vpop.f32.mrb[0].mxu0
  %136 = vmatprep.mubr.bf16.mxu0 0
  %137 = vmatmul.mubr.bf16.gmra.mrb[0].mxu0 %v67
  %v138 = vpop.f32.mrb[0].mxu0
  %v139 = vadd.f32 %v57, %v138
  %v140 = vpop.f32.mrb[0].mxu0
  %v141 = vpop.f32.mrb[0].mxu0
  %v142 = vadd.f32 %v57, %v141
  %v143 = vpop.f32.mrb[0].mxu0
  %144 = vmatprep.mubr.bf16.mxu0 0
  %145 = vmatmul.mubr.bf16.gmra.mrb[0].mxu0 %v70
  %v146 = vpop.f32.mrb[0].mxu0
  %v147 = vadd.f32 %v57, %v146
  %v148 = vpop.f32.mrb[0].mxu0
  %v149 = vpop.f32.mrb[0].mxu0
  %v150 = vadd.f32 %v57, %v149
  %v151 = vpop.f32.mrb[0].mxu0
  %152 = vmatprep.mubr.bf16.mxu0 0
  %153 = vmatmul.mubr.bf16.gmra.mrb[0].mxu0 %v73
  %v154 = vpop.f32.mrb[0].mxu0
  %v155 = vadd.f32 %v57, %v154
  %v156 = vpop.f32.mrb[0].mxu0
  %v157 = vpop.f32.mrb[0].mxu0
  %v158 = vadd.f32 %v57, %v157
  %v159 = vpop.f32.mrb[0].mxu0
  %160 = vmatprep.mubr.bf16.mxu0 0
  %161 = vmatmul.mubr.bf16.gmra.mrb[0].mxu0 %v76
  %v162 = vpop.f32.mrb[0].mxu0
  %v163 = vadd.f32 %v57, %v162
  %v164 = vpop.f32.mrb[0].mxu0
  %v165 = vpop.f32.mrb[0].mxu0
  %v166 = vadd.f32 %v57, %v165
  %v167 = vpop.f32.mrb[0].mxu0
  %168 = vmatprep.mubr.bf16.mxu0 0
  %169 = vmatmul.mubr.bf16.gmra.mrb[0].mxu0 %v79
  %v170 = vpop.f32.mrb[0].mxu0
  %v171 = vadd.f32 %v57, %v170
  %v172 = vpop.f32.mrb[0].mxu0
  %v173 = vpop.f32.mrb[0].mxu0
  %v174 = vadd.f32 %v57, %v173
  %v175 = vpop.f32.mrb[0].mxu0
  %176 = vmatprep.mubr.bf16.mxu0 0
  %177 = vmatmul.mubr.bf16.gmra.mrb[0].mxu0 %v82
  %v178 = vpop.f32.mrb[0].mxu0
  %v179 = vadd.f32 %v57, %v178
  %v180 = vpop.f32.mrb[0].mxu0
  %v181 = vpop.f32.mrb[0].mxu0
  %v182 = vadd.f32 %v57, %v181
  %v183 = vpop.f32.mrb[0].mxu0
  %184 = vdwg.mxu0
  %v185 = vmax.f32 %v123, 0.0
  %v186 = vmax.f32 %v126, 0.0
  %v187 = vmax.f32 %v131, 0.0
  %v188 = vmax.f32 %v134, 0.0
  %v189 = vmax.f32 %v139, 0.0
  %v190 = vmax.f32 %v142, 0.0
  %v191 = vmax.f32 %v147, 0.0
  %v192 = vmax.f32 %v150, 0.0
  %v193 = vmax.f32 %v155, 0.0
  %v194 = vmax.f32 %v158, 0.0
  %v195 = vmax.f32 %v163, 0.0
  %v196 = vmax.f32 %v166, 0.0
  %v197 = vmax.f32 %v171, 0.0
  %v198 = vmax.f32 %v174, 0.0
  %v199 = vmax.f32 %v179, 0.0
  %v200 = vmax.f32 %v182, 0.0
  %v201 = vld [vmem:[%s3] sm:$0xf]
  %v202 = vld [vmem:[%s3 + $0x4] sm:$0xf]
  %v203 = vld [vmem:[%s3 + $0x8] sm:$0xf]
  %v204 = vld [vmem:[%s3 + $0xc] sm:$0xf]
  %v205 = vld [vmem:[%s3 + $0x10] sm:$0xf]
  %v206 = vld [vmem:[%s3 + $0x14] sm:$0xf]
  %v207 = vld [vmem:[%s3 + $0x18] sm:$0xf]
  %v208 = vld [vmem:[%s3 + $0x1c] sm:$0xf]
  %v209 = vld [vmem:[%s3 + $0x20] sm:$0xf]
  %v210 = vld [vmem:[%s3 + $0x24] sm:$0xf]
  %v211 = vld [vmem:[%s3 + $0x28] sm:$0xf]
  %v212 = vld [vmem:[%s3 + $0x2c] sm:$0xf]
  %v213 = vld [vmem:[%s3 + $0x30] sm:$0xf]
  %v214 = vld [vmem:[%s3 + $0x34] sm:$0xf]
  %v215 = vld [vmem:[%s3 + $0x38] sm:$0xf]
  %v216 = vld [vmem:[%s3 + $0x3c] sm:$0xf]
  %v217 = vld [vmem:[%s4] sm:$0x1]
  %v218 = vpack.c.bf16 %v186, %v185
  %v219 = vpack.c.bf16 %v188, %v187
  %v220 = vpack.c.bf16 %v190, %v189
  %v221 = vpack.c.bf16 %v192, %v191
  %v222 = vpack.c.bf16 %v194, %v193
  %v223 = vpack.c.bf16 %v196, %v195
  %v224 = vpack.c.bf16 %v198, %v197
  %v225 = vpack.c.bf16 %v200, %v199
  %v227 = vlaneseq
  %v228 = vshrl.u32 %v227, 7
  %v229 = vsub.s32 0, %v228
  %v230 = vrot.slane %v217, %v229
  %v248 = vunpack.c.l.b16 %v201
  %v249 = vunpack.c.l.b16 %v202
  %v250 = vunpack.c.l.b16 %v203
  %v251 = vunpack.c.l.b16 %v204
  %v252 = vunpack.c.l.b16 %v205
  %v253 = vunpack.c.l.b16 %v206
  %v254 = vunpack.c.l.b16 %v207
  %v255 = vunpack.c.l.b16 %v208
  %v256 = vunpack.c.l.b16 %v209
  %v257 = vunpack.c.l.b16 %v210
  %v258 = vunpack.c.l.b16 %v211
  %v259 = vunpack.c.l.b16 %v212
  %v260 = vunpack.c.l.b16 %v213
  %v261 = vunpack.c.l.b16 %v214
  %v262 = vunpack.c.l.b16 %v215
  %v263 = vunpack.c.l.b16 %v216
  %v264 = vpack.c.b16 %v249, %v248
  %v265 = vpack.c.b16 %v251, %v250
  %v266 = vpack.c.b16 %v253, %v252
  %v267 = vpack.c.b16 %v255, %v254
  %v268 = vpack.c.b16 %v257, %v256
  %v269 = vpack.c.b16 %v259, %v258
  %v270 = vpack.c.b16 %v261, %v260
  %v271 = vpack.c.b16 %v263, %v262
  %280 = vmatprep.subr.bf16.mxu0 0
  %281 = vmatpush1.bf16.msra.mxu0 %v264
  %282 = vmatprep.subr.bf16.mxu0 0
  %283 = vmatpush1.bf16.msra.mxu0 %v265
  %284 = vmatprep.subr.bf16.mxu0 0
  %285 = vmatpush1.bf16.msra.mxu0 %v266
  %286 = vmatprep.subr.bf16.mxu0 0
  %287 = vmatpush1.bf16.msra.mxu0 %v267
  %288 = vmatprep.subr.bf16.mxu0 0
  %289 = vmatpush1.bf16.msra.mxu0 %v268
  %290 = vmatprep.subr.bf16.mxu0 0
  %291 = vmatpush1.bf16.msra.mxu0 %v269
  %292 = vmatprep.subr.bf16.mxu0 0
  %293 = vmatpush1.bf16.msra.mxu0 %v270
  %294 = vmatprep.subr.bf16.mxu0 0
  %295 = vmatpush1.bf16.msra.mxu0 %v271
  %296 = vmatprep.subr.bf16.mxu0 0
  %297 = vmatpush1.bf16.msra.mxu0 0
  %298 = vmatprep.subr.bf16.mxu0 0
  %299 = vmatpush1.bf16.msra.mxu0 0
  %300 = vmatprep.subr.bf16.mxu0 0
  %301 = vmatpush1.bf16.msra.mxu0 0
  %302 = vmatprep.subr.bf16.mxu0 0
  %303 = vmatpush1.bf16.msra.mxu0 0
  %304 = vmatprep.subr.bf16.mxu0 0
  %305 = vmatpush1.bf16.msra.mxu0 0
  %306 = vmatprep.subr.bf16.mxu0 0
  %307 = vmatpush1.bf16.msra.mxu0 0
  %308 = vmatprep.subr.bf16.mxu0 0
  %309 = vmatpush1.bf16.msra.mxu0 0
  %310 = vmatprep.subr.bf16.mxu0 0
  %311 = vmatpush1.bf16.msra.mxu0 0
  %312 = vmatprep.mubr.bf16.mxu0 0
  %313 = vmatmul.mubr.bf16.gmra.mrb[0].mxu0 %v218
  %v314 = vpop.f32.mrb[0].mxu0
  %v315 = vadd.f32 %v230, %v314
  %v316 = vpop.f32.mrb[0].mxu0
  %v317 = vpop.f32.mrb[0].mxu0
  %v318 = vadd.f32 %v230, %v317
  %v319 = vpop.f32.mrb[0].mxu0
  %320 = vmatprep.mubr.bf16.mxu0 0
  %321 = vmatmul.mubr.bf16.gmra.mrb[0].mxu0 %v219
  %v322 = vpop.f32.mrb[0].mxu0
  %v323 = vadd.f32 %v230, %v322
  %v324 = vpop.f32.mrb[0].mxu0
  %v325 = vpop.f32.mrb[0].mxu0
  %v326 = vadd.f32 %v230, %v325
  %v327 = vpop.f32.mrb[0].mxu0
  %328 = vmatprep.mubr.bf16.mxu0 0
  %329 = vmatmul.mubr.bf16.gmra.mrb[0].mxu0 %v220
  %v330 = vpop.f32.mrb[0].mxu0
  %v331 = vadd.f32 %v230, %v330
  %v332 = vpop.f32.mrb[0].mxu0
  %v333 = vpop.f32.mrb[0].mxu0
  %v334 = vadd.f32 %v230, %v333
  %v335 = vpop.f32.mrb[0].mxu0
  %336 = vmatprep.mubr.bf16.mxu0 0
  %337 = vmatmul.mubr.bf16.gmra.mrb[0].mxu0 %v221
  %v338 = vpop.f32.mrb[0].mxu0
  %v339 = vadd.f32 %v230, %v338
  %v340 = vpop.f32.mrb[0].mxu0
  %v341 = vpop.f32.mrb[0].mxu0
  %v342 = vadd.f32 %v230, %v341
  %v343 = vpop.f32.mrb[0].mxu0
  %344 = vmatprep.mubr.bf16.mxu0 0
  %345 = vmatmul.mubr.bf16.gmra.mrb[0].mxu0 %v222
  %v346 = vpop.f32.mrb[0].mxu0
  %v347 = vadd.f32 %v230, %v346
  %v348 = vpop.f32.mrb[0].mxu0
  %v349 = vpop.f32.mrb[0].mxu0
  %v350 = vadd.f32 %v230, %v349
  %v351 = vpop.f32.mrb[0].mxu0
  %352 = vmatprep.mubr.bf16.mxu0 0
  %353 = vmatmul.mubr.bf16.gmra.mrb[0].mxu0 %v223
  %v354 = vpop.f32.mrb[0].mxu0
  %v355 = vadd.f32 %v230, %v354
  %v356 = vpop.f32.mrb[0].mxu0
  %v357 = vpop.f32.mrb[0].mxu0
  %v358 = vadd.f32 %v230, %v357
  %v359 = vpop.f32.mrb[0].mxu0
  %360 = vmatprep.mubr.bf16.mxu0 0
  %361 = vmatmul.mubr.bf16.gmra.mrb[0].mxu0 %v224
  %v362 = vpop.f32.mrb[0].mxu0
  %v363 = vadd.f32 %v230, %v362
  %v364 = vpop.f32.mrb[0].mxu0
  %v365 = vpop.f32.mrb[0].mxu0
  %v366 = vadd.f32 %v230, %v365
  %v367 = vpop.f32.mrb[0].mxu0
  %368 = vmatprep.mubr.bf16.mxu0 0
  %369 = vmatmul.mubr.bf16.gmra.mrb[0].mxu0 %v225
  %v370 = vpop.f32.mrb[0].mxu0
  %v371 = vadd.f32 %v230, %v370
  %v372 = vpop.f32.mrb[0].mxu0
  %v373 = vpop.f32.mrb[0].mxu0
  %v374 = vadd.f32 %v230, %v373
  %v375 = vpop.f32.mrb[0].mxu0
  %376 = vdwg.mxu0
  %v377 = vmax.f32 %v315, 0.0
  %v378 = vmax.f32 %v318, 0.0
  %v379 = vmax.f32 %v323, 0.0
  %v380 = vmax.f32 %v326, 0.0
  %v381 = vmax.f32 %v331, 0.0
  %v382 = vmax.f32 %v334, 0.0
  %v383 = vmax.f32 %v339, 0.0
  %v384 = vmax.f32 %v342, 0.0
  %v385 = vmax.f32 %v347, 0.0
  %v386 = vmax.f32 %v350, 0.0
  %v387 = vmax.f32 %v355, 0.0
  %v388 = vmax.f32 %v358, 0.0
  %v389 = vmax.f32 %v363, 0.0
  %v390 = vmax.f32 %v366, 0.0
  %v391 = vmax.f32 %v371, 0.0
  %v392 = vmax.f32 %v374, 0.0
  %v393 = vld [vmem:[%s5] sm:$0xf]
  %v394 = vld [vmem:[%s5 + $0x4] sm:$0xf]
  %v395 = vld [vmem:[%s5 + $0x8] sm:$0xf]
  %v396 = vld [vmem:[%s5 + $0xc] sm:$0xf]
  %v397 = vld [vmem:[%s5 + $0x10] sm:$0xf]
  %v398 = vld [vmem:[%s5 + $0x14] sm:$0xf]
  %v399 = vld [vmem:[%s5 + $0x18] sm:$0xf]
  %v400 = vld [vmem:[%s5 + $0x1c] sm:$0xf]
  %v401 = vld [vmem:[%s5 + $0x20] sm:$0xf]
  %v402 = vld [vmem:[%s5 + $0x24] sm:$0xf]
  %v403 = vld [vmem:[%s5 + $0x28] sm:$0xf]
  %v404 = vld [vmem:[%s5 + $0x2c] sm:$0xf]
  %v405 = vld [vmem:[%s5 + $0x30] sm:$0xf]
  %v406 = vld [vmem:[%s5 + $0x34] sm:$0xf]
  %v407 = vld [vmem:[%s5 + $0x38] sm:$0xf]
  %v408 = vld [vmem:[%s5 + $0x3c] sm:$0xf]
  %v409 = vld [vmem:[%s6] sm:$0x1]
  %v410 = vpack.c.bf16 %v378, %v377
  %v411 = vpack.c.bf16 %v380, %v379
  %v412 = vpack.c.bf16 %v382, %v381
  %v413 = vpack.c.bf16 %v384, %v383
  %v414 = vpack.c.bf16 %v386, %v385
  %v415 = vpack.c.bf16 %v388, %v387
  %v416 = vpack.c.bf16 %v390, %v389
  %v417 = vpack.c.bf16 %v392, %v391
  %v419 = vlaneseq
  %v420 = vshrl.u32 %v419, 7
  %v421 = vsub.s32 0, %v420
  %v422 = vrot.slane %v409, %v421
  %v440 = vunpack.c.l.b16 %v393
  %v441 = vunpack.c.l.b16 %v394
  %v442 = vunpack.c.l.b16 %v395
  %v443 = vunpack.c.l.b16 %v396
  %v444 = vunpack.c.l.b16 %v397
  %v445 = vunpack.c.l.b16 %v398
  %v446 = vunpack.c.l.b16 %v399
  %v447 = vunpack.c.l.b16 %v400
  %v448 = vunpack.c.l.b16 %v401
  %v449 = vunpack.c.l.b16 %v402
  %v450 = vunpack.c.l.b16 %v403
  %v451 = vunpack.c.l.b16 %v404
  %v452 = vunpack.c.l.b16 %v405
  %v453 = vunpack.c.l.b16 %v406
  %v454 = vunpack.c.l.b16 %v407
  %v455 = vunpack.c.l.b16 %v408
  %v456 = vpack.c.b16 %v441, %v440
  %v457 = vpack.c.b16 %v443, %v442
  %v458 = vpack.c.b16 %v445, %v444
  %v459 = vpack.c.b16 %v447, %v446
  %v460 = vpack.c.b16 %v449, %v448
  %v461 = vpack.c.b16 %v451, %v450
  %v462 = vpack.c.b16 %v453, %v452
  %v463 = vpack.c.b16 %v455, %v454
  %472 = vmatprep.subr.bf16.mxu0 0
  %473 = vmatpush1.bf16.msra.mxu0 %v456
  %474 = vmatprep.subr.bf16.mxu0 0
  %475 = vmatpush1.bf16.msra.mxu0 %v457
  %476 = vmatprep.subr.bf16.mxu0 0
  %477 = vmatpush1.bf16.msra.mxu0 %v458
  %478 = vmatprep.subr.bf16.mxu0 0
  %479 = vmatpush1.bf16.msra.mxu0 %v459
  %480 = vmatprep.subr.bf16.mxu0 0
  %481 = vmatpush1.bf16.msra.mxu0 %v460
  %482 = vmatprep.subr.bf16.mxu0 0
  %483 = vmatpush1.bf16.msra.mxu0 %v461
  %484 = vmatprep.subr.bf16.mxu0 0
  %485 = vmatpush1.bf16.msra.mxu0 %v462
  %486 = vmatprep.subr.bf16.mxu0 0
  %487 = vmatpush1.bf16.msra.mxu0 %v463
  %488 = vmatprep.subr.bf16.mxu0 0
  %489 = vmatpush1.bf16.msra.mxu0 0
  %490 = vmatprep.subr.bf16.mxu0 0
  %491 = vmatpush1.bf16.msra.mxu0 0
  %492 = vmatprep.subr.bf16.mxu0 0
  %493 = vmatpush1.bf16.msra.mxu0 0
  %494 = vmatprep.subr.bf16.mxu0 0
  %495 = vmatpush1.bf16.msra.mxu0 0
  %496 = vmatprep.subr.bf16.mxu0 0
  %497 = vmatpush1.bf16.msra.mxu0 0
  %498 = vmatprep.subr.bf16.mxu0 0
  %499 = vmatpush1.bf16.msra.mxu0 0
  %500 = vmatprep.subr.bf16.mxu0 0
  %501 = vmatpush1.bf16.msra.mxu0 0
  %502 = vmatprep.subr.bf16.mxu0 0
  %503 = vmatpush1.bf16.msra.mxu0 0
  %504 = vmatprep.mubr.bf16.mxu0 0
  %505 = vmatmul.mubr.bf16.gmra.mrb[0].mxu0 %v410
  %v506 = vpop.f32.mrb[0].mxu0
  %v507 = vadd.f32 %v422, %v506
  %v508 = vpop.f32.mrb[0].mxu0
  %v509 = vpop.f32.mrb[0].mxu0
  %v510 = vadd.f32 %v422, %v509
  %v511 = vpop.f32.mrb[0].mxu0
  %512 = vmatprep.mubr.bf16.mxu0 0
  %513 = vmatmul.mubr.bf16.gmra.mrb[0].mxu0 %v411
  %v514 = vpop.f32.mrb[0].mxu0
  %v515 = vadd.f32 %v422, %v514
  %v516 = vpop.f32.mrb[0].mxu0
  %v517 = vpop.f32.mrb[0].mxu0
  %v518 = vadd.f32 %v422, %v517
  %v519 = vpop.f32.mrb[0].mxu0
  %520 = vmatprep.mubr.bf16.mxu0 0
  %521 = vmatmul.mubr.bf16.gmra.mrb[0].mxu0 %v412
  %v522 = vpop.f32.mrb[0].mxu0
  %v523 = vadd.f32 %v422, %v522
  %v524 = vpop.f32.mrb[0].mxu0
  %v525 = vpop.f32.mrb[0].mxu0
  %v526 = vadd.f32 %v422, %v525
  %v527 = vpop.f32.mrb[0].mxu0
  %528 = vmatprep.mubr.bf16.mxu0 0
  %529 = vmatmul.mubr.bf16.gmra.mrb[0].mxu0 %v413
  %v530 = vpop.f32.mrb[0].mxu0
  %v531 = vadd.f32 %v422, %v530
  %v532 = vpop.f32.mrb[0].mxu0
  %v533 = vpop.f32.mrb[0].mxu0
  %v534 = vadd.f32 %v422, %v533
  %v535 = vpop.f32.mrb[0].mxu0
  %536 = vmatprep.mubr.bf16.mxu0 0
  %537 = vmatmul.mubr.bf16.gmra.mrb[0].mxu0 %v414
  %v538 = vpop.f32.mrb[0].mxu0
  %v539 = vadd.f32 %v422, %v538
  %v540 = vpop.f32.mrb[0].mxu0
  %v541 = vpop.f32.mrb[0].mxu0
  %v542 = vadd.f32 %v422, %v541
  %v543 = vpop.f32.mrb[0].mxu0
  %544 = vmatprep.mubr.bf16.mxu0 0
  %545 = vmatmul.mubr.bf16.gmra.mrb[0].mxu0 %v415
  %v546 = vpop.f32.mrb[0].mxu0
  %v547 = vadd.f32 %v422, %v546
  %v548 = vpop.f32.mrb[0].mxu0
  %v549 = vpop.f32.mrb[0].mxu0
  %v550 = vadd.f32 %v422, %v549
  %v551 = vpop.f32.mrb[0].mxu0
  %552 = vmatprep.mubr.bf16.mxu0 0
  %553 = vmatmul.mubr.bf16.gmra.mrb[0].mxu0 %v416
  %v554 = vpop.f32.mrb[0].mxu0
  %v555 = vadd.f32 %v422, %v554
  %v556 = vpop.f32.mrb[0].mxu0
  %v557 = vpop.f32.mrb[0].mxu0
  %v558 = vadd.f32 %v422, %v557
  %v559 = vpop.f32.mrb[0].mxu0
  %560 = vmatprep.mubr.bf16.mxu0 0
  %561 = vmatmul.mubr.bf16.gmra.mrb[0].mxu0 %v417
  %v562 = vpop.f32.mrb[0].mxu0
  %v563 = vadd.f32 %v422, %v562
  %v564 = vpop.f32.mrb[0].mxu0
  %v565 = vpop.f32.mrb[0].mxu0
  %v566 = vadd.f32 %v422, %v565
  %v567 = vpop.f32.mrb[0].mxu0
  %568 = vdwg.mxu0
  %569 = vst [vmem:[%s7] sm:$0xff] %v507
  %570 = vst [vmem:[%s7 + $0x8] sm:$0xff] %v510
  %571 = vst [vmem:[%s7 + $0x10] sm:$0xff] %v515
  %572 = vst [vmem:[%s7 + $0x18] sm:$0xff] %v518
  %573 = vst [vmem:[%s7 + $0x20] sm:$0xff] %v523
  %574 = vst [vmem:[%s7 + $0x28] sm:$0xff] %v526
  %575 = vst [vmem:[%s7 + $0x30] sm:$0xff] %v531
  %576 = vst [vmem:[%s7 + $0x38] sm:$0xff] %v534
  %577 = vst [vmem:[%s7 + $0x40] sm:$0xff] %v539
  %578 = vst [vmem:[%s7 + $0x48] sm:$0xff] %v542
  %579 = vst [vmem:[%s7 + $0x50] sm:$0xff] %v547
  %580 = vst [vmem:[%s7 + $0x58] sm:$0xff] %v550
  %581 = vst [vmem:[%s7 + $0x60] sm:$0xff] %v555
  %582 = vst [vmem:[%s7 + $0x68] sm:$0xff] %v558
  %583 = vst [vmem:[%s7 + $0x70] sm:$0xff] %v563
  %584 = vst [vmem:[%s7 + $0x78] sm:$0xff] %v566
  // Predicated region
  $region30: #{_forward_impl.1} parent=0 // pred_check
    _
  $region31: #{_forward_impl.1} parent=0 // pred_check_branch
    %586 = sbr.rel (0) target = $region33
  $region32: #{_forward_impl.1} parent=0 // pred_region
    _
  $region33: #{_forward_impl.1} parent=0 // pred_fallthru
    _
  // Predicated region
  $region34: #{_forward_impl.1} parent=0 // pred_check
    _
  $region35: #{_forward_impl.1} parent=0 // pred_check_branch
    %588 = sbr.rel (0) target = $region37
  $region36: #{_forward_impl.1} parent=0 // pred_region
    _
  $region37: #{_forward_impl.1} parent=0 // pred_fallthru
    _

</llo_original>
